<compile_context>
chip_gen: v7x
topology: tpu7x:2x2x1
jax: 0.10.0
libtpu: 0.0.40
codegen_flags: <defaults>
</compile_context>

<pallas_src>
import functools

import jax
import jax.numpy as jnp
from jax.experimental import pallas as pl
from jax.experimental.pallas import tpu as pltpu


# ---------------------------------------------------------------------------
# Kernels
# ---------------------------------------------------------------------------

def _se_single_pass_kernel(x_ref, w1t_ref, b1_ref, w2t_ref, b2_ref, o_ref):
    """One grid step = a block of Nb images, full (C, HW) slab resident."""
    x = x_ref[...]                                          # (Nb, C, HW)
    # Squeeze: global average pool with f32 accumulation.
    pooled = jnp.mean(x, axis=2, dtype=jnp.float32)         # (Nb, C)
    # Excitation: (Nb, C) @ (C, Cr) -> ReLU -> (Nb, Cr) @ (Cr, C) -> sigmoid.
    h = jnp.dot(pooled, w1t_ref[...],
                preferred_element_type=jnp.float32) + b1_ref[...]
    h = jnp.maximum(h, 0.0)
    g = jnp.dot(h, w2t_ref[...],
                preferred_element_type=jnp.float32) + b2_ref[...]
    g = jax.nn.sigmoid(g).astype(x.dtype)                   # (Nb, C)
    # Scale: broadcast the per-channel gate over the spatial (lane) axis.
    o_ref[...] = x * g[:, :, None]


def _se_pool_gate_kernel(x_ref, w1t_ref, b1_ref, w2t_ref, b2_ref, g_ref,
                         sum_ref, *, inv_hw):
    """Pass 1 of the HW-tiled fallback: accumulate pooled sum, emit gate."""
    hw_step = pl.program_id(1)

    @pl.when(hw_step == 0)
    def _():
        sum_ref[...] = jnp.zeros_like(sum_ref)

    # f32 accumulation without materializing an f32 copy of the whole tile.
    sum_ref[...] += jnp.sum(x_ref[...], axis=2, dtype=jnp.float32)

    @pl.when(hw_step == pl.num_programs(1) - 1)
    def _():
        pooled = sum_ref[...] * inv_hw                      # (Nb, C)
        h = jnp.dot(pooled, w1t_ref[...],
                    preferred_element_type=jnp.float32) + b1_ref[...]
        h = jnp.maximum(h, 0.0)
        g = jax.nn.sigmoid(
            jnp.dot(h, w2t_ref[...],
                    preferred_element_type=jnp.float32) + b2_ref[...])
        # Gate stored as (Nb, C, 1): C on sublanes so pass 2 can broadcast it
        # over HW without an in-kernel transpose (the tensor is tiny).
        g_ref[...] = g.astype(g_ref.dtype)[:, :, None]


def _se_scale_kernel(x_ref, g_ref, o_ref):
    """Pass 2 of the HW-tiled fallback: apply the channel gate to an x tile."""
    o_ref[...] = x_ref[...] * g_ref[...]


# ---------------------------------------------------------------------------
# Sizing helpers
# ---------------------------------------------------------------------------

def _vmem_budget():
    """(scoped VMEM limit, x-block budget) sized per TPU generation."""
    try:
        cap = pltpu.get_tpu_info().vmem_capacity_bytes
    except Exception:
        cap = 64 * 1024 * 1024                  # be conservative (v7x-like)
    if cap >= 128 * 1024 * 1024:                # v5e / v6e: 128 MiB VMEM
        return 96 * 1024 * 1024, 20 * 1024 * 1024
    # v7x: 64 MiB VMEM -> 2 in + 2 out buffers (~4x block) + weights must fit.
    return 48 * 1024 * 1024, 10 * 1024 * 1024


def _choose_batch_block(n, bytes_per_image, block_budget_bytes):
    """Batch block Nb (need not divide N; grid uses cdiv).

    Preference order: (a) >= 2 grid steps so the 'parallel' batch axis can
    shard across v7x's two TensorCores, (b) an even step count >= 4 (balanced
    cores + real prefetch/writeback pipeline), (c) the largest Nb that fits
    the VMEM block budget (amortizes per-step overhead).
    """
    if bytes_per_image > block_budget_bytes:
        return None                              # one image too big -> two-pass
    nb_limit = max(1, min(n, block_budget_bytes // max(bytes_per_image, 1)))
    best_key, best_nb = None, None
    for nb in range(1, nb_limit + 1):
        steps = pl.cdiv(n, nb)
        key = (steps >= 2, steps % 2 == 0 and steps >= 4, nb)
        if best_key is None or key > best_key:
            best_key, best_nb = key, nb
    return best_nb


def _choose_hw_tile(hw, c, itemsize, block_budget_bytes):
    """Largest divisor of HW (prefer 128-lane aligned) within the block budget.

    Exact divisors only: the pooling pass accumulates every tile, so the last
    tile must never contain padded garbage.
    """
    budget_cols = max(1, block_budget_bytes // (c * itemsize))
    best_key, best_d = None, 1
    for d in range(1, hw + 1):
        if hw % d != 0 or d > budget_cols:
            continue
        key = (d % 128 == 0, d)
        if best_key is None or key > best_key:
            best_key, best_d = key, d
    return best_d


# ---------------------------------------------------------------------------
# pallas_call wrappers
# ---------------------------------------------------------------------------

def _weight_spec():
    # Whole-array VMEM placement: resident once for the entire grid, no
    # double-buffering, no per-step re-DMA.
    return pl.BlockSpec(memory_space=pltpu.MemorySpace.VMEM)


def _se_single_pass(x2, w1t, b1r, w2t, b2r, nb, vmem_limit):
    n, c, hw = x2.shape
    block = (nb, c, hw)
    return pl.pallas_call(
        _se_single_pass_kernel,
        out_shape=jax.ShapeDtypeStruct(x2.shape, x2.dtype),
        grid=(pl.cdiv(n, nb),),
        in_specs=[
            pl.BlockSpec(block, lambda i: (i, 0, 0)),
            _weight_spec(), _weight_spec(), _weight_spec(), _weight_spec(),
        ],
        out_specs=pl.BlockSpec(block, lambda i: (i, 0, 0)),
        compiler_params=pltpu.CompilerParams(
            dimension_semantics=("parallel",),
            vmem_limit_bytes=vmem_limit),
    )(x2, w1t, b1r, w2t, b2r)


def _se_two_pass(x2, w1t, b1r, w2t, b2r, hw_tile, vmem_limit):
    """Fallback when one image's (C, HW) slab exceeds the VMEM block budget."""
    n, c, hw = x2.shape
    assert hw % hw_tile == 0, "hw_tile must divide H*W (pooling correctness)"
    nb = 1                                               # images are large here
    x_block = (nb, c, hw_tile)
    x_map = lambda b, h: (b, 0, h)
    g_shape, g_block = (n, c, 1), (nb, c, 1)
    g_map = lambda b, h: (b, 0, 0)

    pool_kernel = functools.partial(_se_pool_gate_kernel, inv_hw=1.0 / float(hw))
    gate = pl.pallas_call(
        pool_kernel,
        out_shape=jax.ShapeDtypeStruct(g_shape, x2.dtype),
        grid=(n, hw // hw_tile),
        in_specs=[pl.BlockSpec(x_block, x_map),
                  _weight_spec(), _weight_spec(), _weight_spec(), _weight_spec()],
        out_specs=pl.BlockSpec(g_block, g_map),
        scratch_shapes=[pltpu.VMEM((nb, c), jnp.float32)],
        compiler_params=pltpu.CompilerParams(
            dimension_semantics=("parallel", "arbitrary"),
            vmem_limit_bytes=vmem_limit),
    )(x2, w1t, b1r, w2t, b2r)

    return pl.pallas_call(
        _se_scale_kernel,
        out_shape=jax.ShapeDtypeStruct(x2.shape, x2.dtype),
        grid=(n, hw // hw_tile),
        in_specs=[pl.BlockSpec(x_block, x_map), pl.BlockSpec(g_block, g_map)],
        out_specs=pl.BlockSpec(x_block, x_map),
        compiler_params=pltpu.CompilerParams(
            dimension_semantics=("parallel", "parallel"),
            vmem_limit_bytes=vmem_limit),
    )(x2, gate)


def se_module(x, w1, b1, w2, b2, *, force_two_pass=False, hw_tile=None):
    """SE forward. x: (N, C, H, W); w1: (Cr, C); b1: (Cr,); w2: (C, Cr); b2: (C,)."""
    n, c, hgt, wdt = x.shape
    cr = w1.shape[0]
    hw = hgt * wdt

    # Channels-first throughout: a free reshape of the NCHW input; no transpose.
    x2 = x.reshape(n, c, hw)

    # Excitation params in "activation @ weight^T" orientation, biases as rows.
    w1t = jnp.transpose(w1)                              # (C, Cr)
    w2t = jnp.transpose(w2)                              # (Cr, C)
    b1r = b1.reshape(1, cr)
    b2r = b2.reshape(1, c)

    vmem_limit, block_budget = _vmem_budget()
    bytes_per_image = c * hw * x.dtype.itemsize
    nb = None if force_two_pass else _choose_batch_block(
        n, bytes_per_image, block_budget)

    if nb is not None:
        out2 = _se_single_pass(x2, w1t, b1r, w2t, b2r, nb, vmem_limit)
    else:
        tile = hw_tile if hw_tile is not None else _choose_hw_tile(
            hw, c, x.dtype.itemsize, block_budget)
        out2 = _se_two_pass(x2, w1t, b1r, w2t, b2r, tile, vmem_limit)

    return out2.reshape(n, c, hgt, wdt)


# ---------------------------------------------------------------------------
# Parameters / reference
# ---------------------------------------------------------------------------

def init_params(key, channels, reduction):
    """Shapes / init mirroring the PyTorch module (1x1 convs as matrices)."""
    cr = channels // reduction
    k1, k2, k3, k4 = jax.random.split(key, 4)
    w1 = jax.random.normal(k1, (cr, channels), jnp.float32) * jnp.sqrt(2.0 / cr)
    w2 = jax.random.normal(k2, (channels, cr), jnp.float32) * jnp.sqrt(2.0 / channels)
    b1 = jax.random.uniform(k3, (cr,), jnp.float32,
                            -1.0 / jnp.sqrt(channels), 1.0 / jnp.sqrt(channels))
    b2 = jax.random.uniform(k4, (channels,), jnp.float32,
                            -1.0 / jnp.sqrt(cr), 1.0 / jnp.sqrt(cr))
    return w1, b1, w2, b2


def se_reference(x, w1, b1, w2, b2):
    """Pure-JAX reference of the PyTorch forward for verification."""
    pooled = jnp.mean(x, axis=(2, 3))                    # (N, C)
    h = jnp.maximum(pooled @ w1.T + b1, 0.0)             # (N, Cr)
    g = jax.nn.sigmoid(h @ w2.T + b2)                    # (N, C)
    return x * g[:, :, None, None]


if __name__ == "__main__":
    key = jax.random.PRNGKey(0)
    k_small, k_wide, k_odd = jax.random.split(key, 3)

    # Case 1: small NCHW shape, single fused pass.
    N, C, H, W = 2, 16, 16, 16
    kx, kp = jax.random.split(k_small)
    x = jax.random.normal(kx, (N, C, H, W), jnp.float32)
    w1, b1, w2, b2 = init_params(kp, C, reduction=4)
    ref = se_reference(x, w1, b1, w2, b2)
    out = jax.block_until_ready(se_module(x, w1, b1, w2, b2))
    assert out.shape == (N, C, H, W)
    assert jnp.allclose(out, ref, atol=1e-5, rtol=1e-4), "single-pass mismatch"

    # Case 2: force the HW-tiled two-pass fallback at a small shape.
    out_tp = jax.block_until_ready(
        se_module(x, w1, b1, w2, b2, force_two_pass=True, hw_tile=128))
    assert jnp.allclose(out_tp, ref, atol=1e-5, rtol=1e-4), "two-pass fallback mismatch"

    # Case 3: odd batch -> cdiv grid with a partial last block (dropped OOB rows).
    kx3, kp3 = jax.random.split(k_odd)
    x3 = jax.random.normal(kx3, (3, C, H, W), jnp.float32)
    params3 = init_params(kp3, C, reduction=4)
    ref3 = se_reference(x3, *params3)
    out3 = jax.block_until_ready(se_module(x3, *params3))
    assert jnp.allclose(out3, ref3, atol=1e-5, rtol=1e-4), "odd-batch (cdiv) mismatch"

    # Case 4: realistic SE placement (C=128, HW=49) — still channels-first,
    # no wrapper transpose; block spans full (C, HW) so layout is legal.
    N2, C2, H2, W2 = 2, 128, 7, 7
    kx2, kp2 = jax.random.split(k_wide)
    xb = jax.random.normal(kx2, (N2, C2, H2, W2), jnp.float32)
    params_b = init_params(kp2, C2, reduction=4)
    ref_b = se_reference(xb, *params_b)
    out_b = jax.block_until_ready(se_module(xb, *params_b))
    assert jnp.allclose(out_b, ref_b, atol=1e-5, rtol=1e-4), "wide-channel mismatch"

    print("KERNEL_OK")
</pallas_src>

<mosaic_0001>
module attributes {stable_mosaic.version = 11 : i64} {
  func.func @_se_single_pass_kernel(%arg0: i32, %arg1: memref<1x16x256xf32, #tpu.memory_space<vmem>>, %arg2: memref<16x4xf32, #tpu.memory_space<vmem>>, %arg3: memref<1x4xf32, #tpu.memory_space<vmem>>, %arg4: memref<4x16xf32, #tpu.memory_space<vmem>>, %arg5: memref<1x16xf32, #tpu.memory_space<vmem>>, %arg6: memref<1x16x256xf32, #tpu.memory_space<vmem>>) attributes {dimension_semantics = [#tpu.dimension_semantics<parallel>], iteration_bounds = array<i64: 2>, scalar_prefetch = 0 : i64, scratch_operands = 0 : i64, tpu.core_type = #tpu.core_type<tc>, window_params = [{transform_indices = @transform_0, window_bounds = array<i64: 1, 16, 256>}, {pipeline_mode = #tpu.pipeline_mode<synchronous>, transform_indices = @transform_1, window_bounds = array<i64: 16, 4>}, {pipeline_mode = #tpu.pipeline_mode<synchronous>, transform_indices = @transform_2, window_bounds = array<i64: 1, 4>}, {pipeline_mode = #tpu.pipeline_mode<synchronous>, transform_indices = @transform_3, window_bounds = array<i64: 4, 16>}, {pipeline_mode = #tpu.pipeline_mode<synchronous>, transform_indices = @transform_4, window_bounds = array<i64: 1, 16>}, {transform_indices = @transform_5, window_bounds = array<i64: 1, 16, 256>}]} {
    %c0 = arith.constant 0 : index
    %c0_0 = arith.constant 0 : index
    %c0_1 = arith.constant 0 : index
    %0 = vector.load %arg1[%c0, %c0_0, %c0_1] : memref<1x16x256xf32, #tpu.memory_space<vmem>>, vector<1x16x256xf32>
    %cst = arith.constant dense<0.000000e+00> : vector<1x16xf32>
    %1 = vector.multi_reduction <add>, %0, %cst [2] : vector<1x16x256xf32> to vector<1x16xf32>
    %cst_2 = arith.constant 2.560000e+02 : f32
    %2 = vector.broadcast %cst_2 : f32 to vector<1x16xf32>
    %3 = arith.divf %1, %2 : vector<1x16xf32>
    %c0_3 = arith.constant 0 : index
    %c0_4 = arith.constant 0 : index
    %4 = vector.load %arg2[%c0_3, %c0_4] : memref<16x4xf32, #tpu.memory_space<vmem>>, vector<16x4xf32>
    %cst_5 = arith.constant dense<0.000000e+00> : vector<1x4xf32>
    %5 = tpu.matmul %3, %4, %cst_5 {dimension_numbers = #tpu.dot_dimension_numbers<[1], [0], [0], [1], [0, 0, 1, 1], [], []>} : vector<1x16xf32>, vector<16x4xf32>, vector<1x4xf32> -> vector<1x4xf32>
    %c0_6 = arith.constant 0 : index
    %c0_7 = arith.constant 0 : index
    %6 = vector.load %arg3[%c0_6, %c0_7] : memref<1x4xf32, #tpu.memory_space<vmem>>, vector<1x4xf32>
    %7 = arith.addf %5, %6 : vector<1x4xf32>
    %cst_8 = arith.constant 0.000000e+00 : f32
    %8 = vector.broadcast %cst_8 : f32 to vector<1x4xf32>
    %9 = arith.maximumf %7, %8 : vector<1x4xf32>
    %c0_9 = arith.constant 0 : index
    %c0_10 = arith.constant 0 : index
    %10 = vector.load %arg4[%c0_9, %c0_10] : memref<4x16xf32, #tpu.memory_space<vmem>>, vector<4x16xf32>
    %cst_11 = arith.constant dense<0.000000e+00> : vector<1x16xf32>
    %11 = tpu.matmul %9, %10, %cst_11 {dimension_numbers = #tpu.dot_dimension_numbers<[1], [0], [0], [1], [0, 0, 1, 1], [], []>} : vector<1x4xf32>, vector<4x16xf32>, vector<1x16xf32> -> vector<1x16xf32>
    %c0_12 = arith.constant 0 : index
    %c0_13 = arith.constant 0 : index
    %12 = vector.load %arg5[%c0_12, %c0_13] : memref<1x16xf32, #tpu.memory_space<vmem>>, vector<1x16xf32>
    %13 = arith.addf %11, %12 : vector<1x16xf32>
    %14 = arith.negf %13 : vector<1x16xf32>
    %15 = math.exp %14 : vector<1x16xf32>
    %cst_14 = arith.constant 1.000000e+00 : f32
    %16 = vector.broadcast %cst_14 : f32 to vector<1x16xf32>
    %17 = arith.addf %16, %15 : vector<1x16xf32>
    %18 = arith.divf %16, %17 : vector<1x16xf32>
    %19 = vector.shape_cast %18 : vector<1x16xf32> to vector<1x16x1xf32>
    %20 = vector.broadcast %19 : vector<1x16x1xf32> to vector<1x16x256xf32>
    %21 = arith.mulf %0, %20 : vector<1x16x256xf32>
    %c0_15 = arith.constant 0 : index
    %c0_16 = arith.constant 0 : index
    %c0_17 = arith.constant 0 : index
    %22 = vector.load %arg6[%c0_15, %c0_16, %c0_17] : memref<1x16x256xf32, #tpu.memory_space<vmem>>, vector<1x16x256xf32>
    tpu.vector_store %arg6[%c0_15, %c0_16, %c0_17], %21 {strides = array<i32>} : memref<1x16x256xf32, #tpu.memory_space<vmem>>, vector<1x16x256xf32>,
    return
  }
  func.func @transform_0(%arg0: i32) -> (i32, i32, i32) {
    %c0_i32 = arith.constant 0 : i32
    %c0_i32_0 = arith.constant 0 : i32
    %c0_i32_1 = arith.constant 0 : i32
    return %arg0, %c0_i32, %c0_i32_0 : i32, i32, i32
  }
  func.func @transform_1(%arg0: i32) -> (i32, i32) {
    %c0_i32 = arith.constant 0 : i32
    %c0_i32_0 = arith.constant 0 : i32
    %c0_i32_1 = arith.constant 0 : i32
    return %c0_i32, %c0_i32_0 : i32, i32
  }
  func.func @transform_2(%arg0: i32) -> (i32, i32) {
    %c0_i32 = arith.constant 0 : i32
    %c0_i32_0 = arith.constant 0 : i32
    %c0_i32_1 = arith.constant 0 : i32
    return %c0_i32, %c0_i32_0 : i32, i32
  }
  func.func @transform_3(%arg0: i32) -> (i32, i32) {
    %c0_i32 = arith.constant 0 : i32
    %c0_i32_0 = arith.constant 0 : i32
    %c0_i32_1 = arith.constant 0 : i32
    return %c0_i32, %c0_i32_0 : i32, i32
  }
  func.func @transform_4(%arg0: i32) -> (i32, i32) {
    %c0_i32 = arith.constant 0 : i32
    %c0_i32_0 = arith.constant 0 : i32
    %c0_i32_1 = arith.constant 0 : i32
    return %c0_i32, %c0_i32_0 : i32, i32
  }
  func.func @transform_5(%arg0: i32) -> (i32, i32, i32) {
    %c0_i32 = arith.constant 0 : i32
    %c0_i32_0 = arith.constant 0 : i32
    %c0_i32_1 = arith.constant 0 : i32
    return %arg0, %c0_i32, %c0_i32_0 : i32, i32, i32
  }
}

</mosaic_0001>

<llo_original>
// kernel: tpu_custom_call.1
$region0: #{tpu_custom_call.1}
  #allocation0 [shape = 'u32[]', space=smem, size = 0x4, offset = 0x4, fixed_abs, tag = 'smem constant byte address 0x4 - core index']
  #allocation1 [shape = 'u32[144,128]{1,0:T(1,128)}', space=vmem, size = 0x12000, scoped, tag = 'internal scratch']
  %s0 = inlined_call_operand.hbm [shape: f32[2,16,256], index: 0, kind: input, shape index: {}]
  %s1 = inlined_call_operand.vmem [shape: f32[16,4], index: 1, kind: input, shape index: {}]
  %s2 = inlined_call_operand.vmem [shape: f32[1,4], index: 2, kind: input, shape index: {}]
  %s3 = inlined_call_operand.vmem [shape: f32[4,16], index: 3, kind: input, shape index: {}]
  %s4 = inlined_call_operand.vmem [shape: f32[1,16], index: 4, kind: input, shape index: {}]
  %s5 = inlined_call_operand.hbm [shape: f32[2,16,256], index: 5, kind: output, shape index: {}]
  %s6 = sld [smem:[#allocation0]]
  $region57: #{tpu_custom_call.1} parent=0
    _
  %s8 = ssub.s32 1, %s6
  %s9 = scalar_select 0, %s8, %s6
  $region1: #{tpu_custom_call.1} parent=0
    #allocation2 [shape = 'u8[32768]{0}', space=vmem, size = 0x8000, scoped, tag = 'input window, operand 0']
    #allocation3 [shape = 's32[2]{0}', space=sflag, size = 0x8, scoped, tag = 'scoped memory for tpu_custom_call.1']
    #allocation4 [shape = 's32[2]{0}', space=sflag, size = 0x8, scoped, tag = 'scoped memory for tpu_custom_call.1']
    #allocation5 [shape = 'u8[32768]{0}', space=vmem, size = 0x8000, scoped, tag = 'output window, operand 0']
    %10 = vsyncpa [#allocation3], 0
    %s11 = scalar_lea.sflag [#allocation3], 1
    %12 = vsyncpa %s11, 0
    %13 = vsyncpa [#allocation4], 0
    %s14 = scalar_lea.sflag [#allocation4], 1
    %15 = vsyncpa %s14, 0
    loop: start=0, step=1, limit=4
    $region2: #{tpu_custom_call.1} parent=1 // loop_pre_header
      _
    $region3: #{tpu_custom_call.1} parent=1 // loop_header
      %s17 = sphi 0, %s21
      %p18 = scmp.ge.s32.totalorder %s17, 4
      %s27 = sphi 0, %s29
      %s30 = sphi 0, %s27
      %s31 = sphi 0, %s30
      %s47 = sphi 0, %s31
      %s51 = sphi 0, %s51
      %s53 = sphi 0, %s51
      %s54 = sphi 0, %s53
      %s68 = sphi 0, %s54
      %s72 = sphi 0, %s72
      %s74 = sphi 0, %s72
      %s75 = sphi 0, %s74
      %s89 = sphi 0, %s75
      %s93 = sphi 0, %s93
      %s95 = sphi 0, %s93
      %s96 = sphi 0, %s95
      %s110 = sphi 0, %s96
      %s114 = sphi 0, %s114
      %s116 = sphi 0, %s114
      %s117 = sphi 0, %s116
      %s131 = sphi 0, %s117
      %s137 = sphi 0, %s139
      %s140 = sphi 0, %s137
      %s141 = sphi 0, %s140
      %s157 = sphi 0, %s141
    $region4: #{tpu_custom_call.1} parent=1 // loop_header_branch
      %20 = sbr.rel (%p18) target = $region8
    $region5: #{tpu_custom_call.1} parent=1 // loop_body
      %s22 = ssub.s32 %s17, 1
      %s23 = ssub.s32 %s17, 2
      %s24 = sadd.s32 %s17, 1
      %s25 = ssub.s32 %s17, %s24
      %p26 = scmp.eq.s32.totalorder %s25, 0
      %s28 = sadd.s32 %s27, 1
      %s29 = scalar_select %p26, %s27, %s28
      %p32 = pneg %p26
      %p33 = scmp.eq.s32.totalorder %s17, 1
      %p34 = por %p32, %p33
      %p35 = scmp.ne.s32.totalorder %s27, %s30
      %p36 = scmp.eq.s32.totalorder %s17, 0
      %p37 = por %p35, %p36
      %p38 = scmp.ne.s32.totalorder %s27, %s30
      %p39 = scmp.eq.s32.totalorder %s22, 1
      %p40 = por %p38, %p39
      %p41 = scmp.ne.s32.totalorder %s30, %s31
      %p42 = scmp.eq.s32.totalorder %s22, 0
      %p43 = por %p41, %p42
      %p44 = scmp.ne.s32.totalorder %s30, %s31
      %p45 = scmp.eq.s32.totalorder %s23, 1
      %p46 = por %p44, %p45
      %p48 = scmp.ne.s32.totalorder %s31, %s47
      %p49 = scmp.eq.s32.totalorder %s23, 0
      %p50 = por %p48, %p49
      %s52 = sadd.s32 %s51, 1
      %p55 = scmp.eq.s32.totalorder %s17, 1
      %p56 = scmp.ne.s32.totalorder %s51, %s53
      %p57 = scmp.eq.s32.totalorder %s17, 0
      %p58 = por %p56, %p57
      %p59 = scmp.ne.s32.totalorder %s51, %s53
      %p60 = scmp.eq.s32.totalorder %s22, 1
      %p61 = por %p59, %p60
      %p62 = scmp.ne.s32.totalorder %s53, %s54
      %p63 = scmp.eq.s32.totalorder %s22, 0
      %p64 = por %p62, %p63
      %p65 = scmp.ne.s32.totalorder %s53, %s54
      %p66 = scmp.eq.s32.totalorder %s23, 1
      %p67 = por %p65, %p66
      %p69 = scmp.ne.s32.totalorder %s54, %s68
      %p70 = scmp.eq.s32.totalorder %s23, 0
      %p71 = por %p69, %p70
      %s73 = sadd.s32 %s72, 1
      %p76 = scmp.eq.s32.totalorder %s17, 1
      %p77 = scmp.ne.s32.totalorder %s72, %s74
      %p78 = scmp.eq.s32.totalorder %s17, 0
      %p79 = por %p77, %p78
      %p80 = scmp.ne.s32.totalorder %s72, %s74
      %p81 = scmp.eq.s32.totalorder %s22, 1
      %p82 = por %p80, %p81
      %p83 = scmp.ne.s32.totalorder %s74, %s75
      %p84 = scmp.eq.s32.totalorder %s22, 0
      %p85 = por %p83, %p84
      %p86 = scmp.ne.s32.totalorder %s74, %s75
      %p87 = scmp.eq.s32.totalorder %s23, 1
      %p88 = por %p86, %p87
      %p90 = scmp.ne.s32.totalorder %s75, %s89
      %p91 = scmp.eq.s32.totalorder %s23, 0
      %p92 = por %p90, %p91
      %s94 = sadd.s32 %s93, 1
      %p97 = scmp.eq.s32.totalorder %s17, 1
      %p98 = scmp.ne.s32.totalorder %s93, %s95
      %p99 = scmp.eq.s32.totalorder %s17, 0
      %p100 = por %p98, %p99
      %p101 = scmp.ne.s32.totalorder %s93, %s95
      %p102 = scmp.eq.s32.totalorder %s22, 1
      %p103 = por %p101, %p102
      %p104 = scmp.ne.s32.totalorder %s95, %s96
      %p105 = scmp.eq.s32.totalorder %s22, 0
      %p106 = por %p104, %p105
      %p107 = scmp.ne.s32.totalorder %s95, %s96
      %p108 = scmp.eq.s32.totalorder %s23, 1
      %p109 = por %p107, %p108
      %p111 = scmp.ne.s32.totalorder %s96, %s110
      %p112 = scmp.eq.s32.totalorder %s23, 0
      %p113 = por %p111, %p112
      %s115 = sadd.s32 %s114, 1
      %p118 = scmp.eq.s32.totalorder %s17, 1
      %p119 = scmp.ne.s32.totalorder %s114, %s116
      %p120 = scmp.eq.s32.totalorder %s17, 0
      %p121 = por %p119, %p120
      %p122 = scmp.ne.s32.totalorder %s114, %s116
      %p123 = scmp.eq.s32.totalorder %s22, 1
      %p124 = por %p122, %p123
      %p125 = scmp.ne.s32.totalorder %s116, %s117
      %p126 = scmp.eq.s32.totalorder %s22, 0
      %p127 = por %p125, %p126
      %p128 = scmp.ne.s32.totalorder %s116, %s117
      %p129 = scmp.eq.s32.totalorder %s23, 1
      %p130 = por %p128, %p129
      %p132 = scmp.ne.s32.totalorder %s117, %s131
      %p133 = scmp.eq.s32.totalorder %s23, 0
      %p134 = por %p132, %p133
      %s135 = ssub.s32 %s17, %s24
      %p136 = scmp.eq.s32.totalorder %s135, 0
      %s138 = sadd.s32 %s137, 1
      %s139 = scalar_select %p136, %s137, %s138
      %p142 = pneg %p136
      %p143 = scmp.eq.s32.totalorder %s17, 1
      %p144 = por %p142, %p143
      %p145 = scmp.ne.s32.totalorder %s137, %s140
      %p146 = scmp.eq.s32.totalorder %s17, 0
      %p147 = por %p145, %p146
      %p148 = scmp.ne.s32.totalorder %s137, %s140
      %p149 = scmp.eq.s32.totalorder %s22, 1
      %p150 = por %p148, %p149
      %p151 = scmp.ne.s32.totalorder %s140, %s141
      %p152 = scmp.eq.s32.totalorder %s22, 0
      %p153 = por %p151, %p152
      %p154 = scmp.ne.s32.totalorder %s140, %s141
      %p155 = scmp.eq.s32.totalorder %s23, 1
      %p156 = por %p154, %p155
      %p158 = scmp.ne.s32.totalorder %s141, %s157
      %p159 = scmp.eq.s32.totalorder %s23, 0
      %p160 = por %p158, %p159
      %p161 = scmp.le.s32.totalorder 1, %s17
      %p162 = scmp.lt.s32.totalorder %s17, 3
      %p163 = pnand %p161, %p162
      %p164 = pneg %p163
      // Predicated region
      $region9: #{tpu_custom_call.1} parent=5 // pred_check
        _
      $region10: #{tpu_custom_call.1} parent=5 // pred_check_branch
        %166 = sbr.rel (%p163) target = $region12
      $region11: #{tpu_custom_call.1} parent=5 // pred_region
        %s167 = ssub.s32 %s17, 1
        // Predicated region
        $region13: #{tpu_custom_call.1} parent=11 // pred_check
          %p168 = pneg %p64
        $region14: #{tpu_custom_call.1} parent=11 // pred_check_branch
          %170 = sbr.rel (%p168) target = $region16
        $region15: #{tpu_custom_call.1} parent=11 // pred_region
          _
        $region16: #{tpu_custom_call.1} parent=11 // pred_fallthru
          _
        // Predicated region
        $region17: #{tpu_custom_call.1} parent=11 // pred_check
          %p171 = pneg %p85
        $region18: #{tpu_custom_call.1} parent=11 // pred_check_branch
          %173 = sbr.rel (%p171) target = $region20
        $region19: #{tpu_custom_call.1} parent=11 // pred_region
          _
        $region20: #{tpu_custom_call.1} parent=11 // pred_fallthru
          _
        // Predicated region
        $region21: #{tpu_custom_call.1} parent=11 // pred_check
          %p174 = pneg %p106
        $region22: #{tpu_custom_call.1} parent=11 // pred_check_branch
          %176 = sbr.rel (%p174) target = $region24
        $region23: #{tpu_custom_call.1} parent=11 // pred_region
          _
        $region24: #{tpu_custom_call.1} parent=11 // pred_fallthru
          _
        // Predicated region
        $region25: #{tpu_custom_call.1} parent=11 // pred_check
          %p177 = pneg %p127
        $region26: #{tpu_custom_call.1} parent=11 // pred_check_branch
          %179 = sbr.rel (%p177) target = $region28
        $region27: #{tpu_custom_call.1} parent=11 // pred_region
          _
        $region28: #{tpu_custom_call.1} parent=11 // pred_fallthru
          _
      $region12: #{tpu_custom_call.1} parent=5 // pred_fallthru
        _
      %p180 = scmp.lt.s32.totalorder %s17, 2
      // Predicated region
      $region29: #{tpu_custom_call.1} parent=5 // pred_check
        %p181 = pneg %p180
      $region30: #{tpu_custom_call.1} parent=5 // pred_check_branch
        %183 = sbr.rel (%p181) target = $region32
      $region31: #{tpu_custom_call.1} parent=5 // pred_region
        // Predicated region
        $region33: #{tpu_custom_call.1} parent=31 // pred_check
          %p184 = pneg %p37
        $region34: #{tpu_custom_call.1} parent=31 // pred_check_branch
          %186 = sbr.rel (%p184) target = $region36
        $region35: #{tpu_custom_call.1} parent=31 // pred_region
          %s187 = sand.u32 %s27, 1
          %s188 = scalar_lea.sflag [#allocation3], %s187
          %s189 = sand.u32 %s27, 1
          %s190 = smul.addr %s189, 32
          %s191 = scalar_lea.vmem [#allocation2], %s190
          %s193 = ssub.s32 512, 512
          %194 = vsyncadd %s188, %s193
          %s195 = smul.addr %s17, 4
          %s196 = smul.addr %s195, 128
          %s197 = scalar_lea.hbm %s0, %s196
          %s198 = sshll.u32 %s191, 4
          %s199 = int_to_ptr.vmem [resolvable:$true] %s198
          %204 = dma.hbm_to_vmem [thread:$0]  %s197, 512, %s199, %s188, 256, 256, 16
        $region36: #{tpu_custom_call.1} parent=31 // pred_fallthru
          _
      $region32: #{tpu_custom_call.1} parent=5 // pred_fallthru
        _
      %p205 = scmp.le.s32.totalorder 1, %s17
      %p206 = scmp.lt.s32.totalorder %s17, 3
      %p207 = pnand %p205, %p206
      %p208 = pneg %p207
      // Predicated region
      $region37: #{tpu_custom_call.1} parent=5 // pred_check
        _
      $region38: #{tpu_custom_call.1} parent=5 // pred_check_branch
        %210 = sbr.rel (%p207) target = $region40
      $region39: #{tpu_custom_call.1} parent=5 // pred_region
        %s211 = ssub.s32 %s17, 1
        %s212 = sand.u32 %s30, 1
        %s213 = scalar_lea.sflag [#allocation3], %s212
        %s214 = sand.u32 %s30, 1
        %s215 = smul.addr %s214, 32
        %s216 = scalar_lea.vmem [#allocation2], %s215
        // Predicated region
        $region41: #{tpu_custom_call.1} parent=39 // pred_check
          %p217 = pneg %p43
        $region42: #{tpu_custom_call.1} parent=39 // pred_check_branch
          %219 = sbr.rel (%p217) target = $region44
        $region43: #{tpu_custom_call.1} parent=39 // pred_region
          %220 = dma.done %s213, 512
        $region44: #{tpu_custom_call.1} parent=39 // pred_fallthru
          _
        %s221 = sand.u32 %s30, 1
        %s222 = scalar_lea.sflag [#allocation3], %s221
        %s223 = sand.u32 %s30, 1
        %s224 = smul.addr %s223, 32
        %s225 = scalar_lea.vmem [#allocation2], %s224
        %p226 = pneg %p43
        %p227 = pneg %p40
        %p228 = pneg %p64
        %p229 = pneg %p61
        %p230 = pneg %p85
        %p231 = pneg %p82
        %p232 = pneg %p106
        %p233 = pneg %p103
        %p234 = pneg %p127
        %p235 = pneg %p124
        %p236 = pneg %p153
        %p237 = pneg %p150
        %s238 = sand.u32 %s140, 1
        %s239 = scalar_lea.sflag [#allocation4], %s238
        %s240 = sand.u32 %s140, 1
        %s241 = smul.addr %s240, 32
        %s242 = scalar_lea.vmem [#allocation5], %s241
        %v243 = vld [vmem:[%s216] sm:$0xff]
        %v244 = vld [vmem:[%s216 + $0x8] sm:$0xff]
        %v245 = vld [vmem:[%s216 + $0x10] sm:$0xff]
        %v246 = vld [vmem:[%s216 + $0x18] sm:$0xff]
        %v247 = vadd.f32 %v243, %v244
        %248 = vadd.xlane.f32.xlu0 %v247
        %v249 = vpop.xlane.xlu0 %248
        %v250 = vadd.f32 %v245, %v246
        %251 = vadd.xlane.f32.xlu0 %v250
        %v252 = vpop.xlane.xlu0 %251
        %v253 = vrcp.pop 256.0
        %v254 = vmul.f32 %v249, %v253
        %v255 = vmul.f32 %v252, %v253
        %v256 = vld [vmem:[%s1] sm:$0xff]
        %v257 = vld [vmem:[%s1 + $0x8] sm:$0xff]
        %v258 = vld [vmem:[%s2] sm:$0x1]
        %v261 = vlaneseq
        %v262 = vand.u32 %v261, 127
        %v263 = vlaneseq
        %v264 = vshrl.u32 %v263, 7
        %v265 = vsub.s32 %v262, %v264
        %v266 = vrot.slane %v254, %v265
        %v267 = vadd.s32 %v262, 4294967288
        %v268 = vlaneseq
        %v269 = vshrl.u32 %v268, 7
        %v270 = vsub.s32 %v267, %v269
        %v271 = vrot.slane %v255, %v270
        %vm272 = vcmask 130112
        %v273 = vsel %vm272, %v271, %v266
        %vm274 = vcmask 130048
        %v275 = vsel %vm274, %v273, 0
        %277 = vmatprep.subr.mxu0 0.0
        %278 = vmatpush1.msra.mxu0 %v256
        %279 = vmatprep.subr.mxu0 0.0
        %280 = vmatpush1.msra.mxu0 %v257
        %281 = vmatprep.subr.mxu0 0.0
        %282 = vmatpush1.msra.mxu0 0.0
        %283 = vmatprep.subr.mxu0 0.0
        %284 = vmatpush1.msra.mxu0 0.0
        %285 = vmatprep.subr.mxu0 0.0
        %286 = vmatpush1.msra.mxu0 0.0
        %287 = vmatprep.subr.mxu0 0.0
        %288 = vmatpush1.msra.mxu0 0.0
        %289 = vmatprep.subr.mxu0 0.0
        %290 = vmatpush1.msra.mxu0 0.0
        %291 = vmatprep.subr.mxu0 0.0
        %292 = vmatpush1.msra.mxu0 0.0
        %293 = vmatprep.subr.mxu0 0.0
        %294 = vmatpush1.msra.mxu0 0.0
        %295 = vmatprep.subr.mxu0 0.0
        %296 = vmatpush1.msra.mxu0 0.0
        %297 = vmatprep.subr.mxu0 0.0
        %298 = vmatpush1.msra.mxu0 0.0
        %299 = vmatprep.subr.mxu0 0.0
        %300 = vmatpush1.msra.mxu0 0.0
        %301 = vmatprep.subr.mxu0 0.0
        %302 = vmatpush1.msra.mxu0 0.0
        %303 = vmatprep.subr.mxu0 0.0
        %304 = vmatpush1.msra.mxu0 0.0
        %305 = vmatprep.subr.mxu0 0.0
        %306 = vmatpush1.msra.mxu0 0.0
        %307 = vmatprep.subr.mxu0 0.0
        %308 = vmatpush1.msra.mxu0 0.0
        %309 = vmatprep.subr.mxu0 0.0
        %310 = vmatpush1.msra.mxu0 0.0
        %311 = vmatprep.subr.mxu0 0.0
        %312 = vmatpush1.msra.mxu0 0.0
        %313 = vmatprep.subr.mxu0 0.0
        %314 = vmatpush1.msra.mxu0 0.0
        %315 = vmatprep.subr.mxu0 0.0
        %316 = vmatpush1.msra.mxu0 0.0
        %317 = vmatprep.subr.mxu0 0.0
        %318 = vmatpush1.msra.mxu0 0.0
        %319 = vmatprep.subr.mxu0 0.0
        %320 = vmatpush1.msra.mxu0 0.0
        %321 = vmatprep.subr.mxu0 0.0
        %322 = vmatpush1.msra.mxu0 0.0
        %323 = vmatprep.subr.mxu0 0.0
        %324 = vmatpush1.msra.mxu0 0.0
        %325 = vmatprep.subr.mxu0 0.0
        %326 = vmatpush1.msra.mxu0 0.0
        %327 = vmatprep.subr.mxu0 0.0
        %328 = vmatpush1.msra.mxu0 0.0
        %329 = vmatprep.subr.mxu0 0.0
        %330 = vmatpush1.msra.mxu0 0.0
        %331 = vmatprep.subr.mxu0 0.0
        %332 = vmatpush1.msra.mxu0 0.0
        %333 = vmatprep.subr.mxu0 0.0
        %334 = vmatpush1.msra.mxu0 0.0
        %335 = vmatprep.subr.mxu0 0.0
        %336 = vmatpush1.msra.mxu0 0.0
        %337 = vmatprep.subr.mxu0 0.0
        %338 = vmatpush1.msra.mxu0 0.0
        %339 = vmatprep.subr.mxu0 0.0
        %340 = vmatpush1.msra.mxu0 0.0
        %341 = vmatprep.mubr.f32.mxu0 0.0
        %342 = vmatmul.mubr.f32.gmra.mrb[0].mxu0 %v275
        %v343 = vpop.f32.mrb[0].mxu0
        %v344 = vadd.f32 %v258, %v343
        %v345 = vpop.f32.mrb[0].mxu0
        %346 = vdwg.mxu0
        %v347 = vmax.f32 %v344, 0.0
        %v348 = vld [vmem:[%s3] sm:$0xf]
        %v349 = vld [vmem:[%s4] sm:$0x1]
        %vm350 = vcmask 31744
        %v352 = vsel %vm350, %v347, 0
        %vm354 = vcmask 1043456
        %v356 = vsel %vm354, %v348, 0
        %358 = vmatprep.subr.mxu0 0.0
        %359 = vmatpush1.msra.mxu0 %v356
        %360 = vmatprep.subr.mxu0 0.0
        %361 = vmatpush1.msra.mxu0 0.0
        %362 = vmatprep.subr.mxu0 0.0
        %363 = vmatpush1.msra.mxu0 0.0
        %364 = vmatprep.subr.mxu0 0.0
        %365 = vmatpush1.msra.mxu0 0.0
        %366 = vmatprep.subr.mxu0 0.0
        %367 = vmatpush1.msra.mxu0 0.0
        %368 = vmatprep.subr.mxu0 0.0
        %369 = vmatpush1.msra.mxu0 0.0
        %370 = vmatprep.subr.mxu0 0.0
        %371 = vmatpush1.msra.mxu0 0.0
        %372 = vmatprep.subr.mxu0 0.0
        %373 = vmatpush1.msra.mxu0 0.0
        %374 = vmatprep.subr.mxu0 0.0
        %375 = vmatpush1.msra.mxu0 0.0
        %376 = vmatprep.subr.mxu0 0.0
        %377 = vmatpush1.msra.mxu0 0.0
        %378 = vmatprep.subr.mxu0 0.0
        %379 = vmatpush1.msra.mxu0 0.0
        %380 = vmatprep.subr.mxu0 0.0
        %381 = vmatpush1.msra.mxu0 0.0
        %382 = vmatprep.subr.mxu0 0.0
        %383 = vmatpush1.msra.mxu0 0.0
        %384 = vmatprep.subr.mxu0 0.0
        %385 = vmatpush1.msra.mxu0 0.0
        %386 = vmatprep.subr.mxu0 0.0
        %387 = vmatpush1.msra.mxu0 0.0
        %388 = vmatprep.subr.mxu0 0.0
        %389 = vmatpush1.msra.mxu0 0.0
        %390 = vmatprep.subr.mxu0 0.0
        %391 = vmatpush1.msra.mxu0 0.0
        %392 = vmatprep.subr.mxu0 0.0
        %393 = vmatpush1.msra.mxu0 0.0
        %394 = vmatprep.subr.mxu0 0.0
        %395 = vmatpush1.msra.mxu0 0.0
        %396 = vmatprep.subr.mxu0 0.0
        %397 = vmatpush1.msra.mxu0 0.0
        %398 = vmatprep.subr.mxu0 0.0
        %399 = vmatpush1.msra.mxu0 0.0
        %400 = vmatprep.subr.mxu0 0.0
        %401 = vmatpush1.msra.mxu0 0.0
        %402 = vmatprep.subr.mxu0 0.0
        %403 = vmatpush1.msra.mxu0 0.0
        %404 = vmatprep.subr.mxu0 0.0
        %405 = vmatpush1.msra.mxu0 0.0
        %406 = vmatprep.subr.mxu0 0.0
        %407 = vmatpush1.msra.mxu0 0.0
        %408 = vmatprep.subr.mxu0 0.0
        %409 = vmatpush1.msra.mxu0 0.0
        %410 = vmatprep.subr.mxu0 0.0
        %411 = vmatpush1.msra.mxu0 0.0
        %412 = vmatprep.subr.mxu0 0.0
        %413 = vmatpush1.msra.mxu0 0.0
        %414 = vmatprep.subr.mxu0 0.0
        %415 = vmatpush1.msra.mxu0 0.0
        %416 = vmatprep.subr.mxu0 0.0
        %417 = vmatpush1.msra.mxu0 0.0
        %418 = vmatprep.subr.mxu0 0.0
        %419 = vmatpush1.msra.mxu0 0.0
        %420 = vmatprep.subr.mxu0 0.0
        %421 = vmatpush1.msra.mxu0 0.0
        %422 = vmatprep.mubr.f32.mxu0 0.0
        %423 = vmatmul.mubr.f32.gmra.mrb[0].mxu0 %v352
        %v424 = vpop.f32.mrb[0].mxu0
        %v425 = vadd.f32 %v349, %v424
        %v426 = vpop.f32.mrb[0].mxu0
        %427 = vdwg.mxu0
        %v428 = vxor.u32 %v425, 2147483648
        %v429 = vmul.f32 %v428, 1.442695
        %v430 = vpow.pop %v429
        %v431 = vadd.f32 %v430, 1.0
        %v432 = vrcp.pop %v431
        %v433 = vmul.f32 1.0, %v432
        %v434 = vlaneseq
        %v435 = vshrl.u32 %v434, 7
        %v436 = vsub.s32 0, %v435
        %v437 = vrot.slane %v433, %v436
        %439 = vbcast.lane.b32.xlu0 %v437, 256
        %v440 = vpop.permute.xlu0 %439
        %s442 = sor.u32 256, 8
        %443 = vbcast.lane.b32.xlu0 %v437, %s442
        %v444 = vpop.permute.xlu0 %443
        %v445 = vmul.f32 %v243, %v440
        %v446 = vmul.f32 %v244, %v440
        %v447 = vmul.f32 %v245, %v444
        %v448 = vmul.f32 %v246, %v444
        %449 = vst [vmem:[%s242] sm:$0xff] %v445
        %450 = vst [vmem:[%s242 + $0x8] sm:$0xff] %v446
        %451 = vst [vmem:[%s242 + $0x10] sm:$0xff] %v447
        %452 = vst [vmem:[%s242 + $0x18] sm:$0xff] %v448
        %s453 = sand.u32 %s140, 1
        %s454 = scalar_lea.sflag [#allocation4], %s453
        %s455 = sand.u32 %s140, 1
        %s456 = smul.addr %s455, 32
        %s457 = scalar_lea.vmem [#allocation5], %s456
        // Predicated region
        $region45: #{tpu_custom_call.1} parent=39 // pred_check
          %p458 = pneg %p150
        $region46: #{tpu_custom_call.1} parent=39 // pred_check_branch
          %460 = sbr.rel (%p458) target = $region48
        $region47: #{tpu_custom_call.1} parent=39 // pred_region
          %s462 = ssub.s32 512, 512
          %463 = vsyncadd %s454, %s462
          %s464 = smul.addr %s22, 4
          %s465 = smul.addr %s464, 128
          %s466 = scalar_lea.hbm %s5, %s465
          %s467 = sshll.u32 %s457, 4
          %s468 = int_to_ptr.vmem [resolvable:$true] %s467
          %473 = dma.vmem_to_hbm [thread:$0]  %s468, 512, %s466, %s454, 256, 256, 16
        $region48: #{tpu_custom_call.1} parent=39 // pred_fallthru
          _
      $region40: #{tpu_custom_call.1} parent=5 // pred_fallthru
        _
      %p474 = scmp.le.s32.totalorder 2, %s17
      // Predicated region
      $region49: #{tpu_custom_call.1} parent=5 // pred_check
        %p475 = pneg %p474
      $region50: #{tpu_custom_call.1} parent=5 // pred_check_branch
        %477 = sbr.rel (%p475) target = $region52
      $region51: #{tpu_custom_call.1} parent=5 // pred_region
        %s478 = ssub.s32 %s17, 2
        // Predicated region
        $region53: #{tpu_custom_call.1} parent=51 // pred_check
          %p479 = pneg %p156
        $region54: #{tpu_custom_call.1} parent=51 // pred_check_branch
          %481 = sbr.rel (%p479) target = $region56
        $region55: #{tpu_custom_call.1} parent=51 // pred_region
          %s482 = sand.u32 %s141, 1
          %s483 = scalar_lea.sflag [#allocation4], %s482
          %s484 = sand.u32 %s141, 1
          %s485 = smul.addr %s484, 32
          %s486 = scalar_lea.vmem [#allocation5], %s485
          %487 = dma.done %s483, 512
        $region56: #{tpu_custom_call.1} parent=51 // pred_fallthru
          _
      $region52: #{tpu_custom_call.1} parent=5 // pred_fallthru
        _
    $region6: #{tpu_custom_call.1} parent=1 // loop_footer
      %s21 = sadd.s32 1, %s17
    $region7: #{tpu_custom_call.1} parent=1 // loop_footer_branch
      %16 = sbr.rel target = $region3
    $region8: #{tpu_custom_call.1} parent=1 // loop_exit
      _
    %488 = vsyncpa [#allocation3], 1
    %s489 = scalar_lea.sflag [#allocation3], 1
    %490 = vsyncpa %s489, 1
    %491 = vsyncpa [#allocation4], 1
    %s492 = scalar_lea.sflag [#allocation4], 1
    %493 = vsyncpa %s492, 1

</llo_original>
